<compile_context>
chip_gen: v6e
topology: v6e:2x2x1
jax: 0.10.0
libtpu: 0.0.40
codegen_flags: <defaults>
</compile_context>

<pallas_src>
import jax
import jax.numpy as jnp
from jax.experimental import pallas as pl


def _fcu_up_global_kernel(x_ref, w_ref, b_ref, o_ref):
    # x_ref: (B, Cin, N)  w_ref: (Cout, Cin)  b_ref: (Cout, 1)  o_ref: (B, Cout, N)
    w = w_ref[...]                     # folded conv*BN weight
    bias = b_ref[...]                  # folded conv+BN bias, (Cout, 1)
    # B is a tiny static constant -> unrolled; each iteration is one 2-D MXU
    # matmul (Cout, Cin) x (Cin, N) with f32 accumulation.
    for b in range(x_ref.shape[0]):
        y = jnp.dot(w, x_ref[b], preferred_element_type=jnp.float32)
        o_ref[b] = jnp.maximum(y + bias, 0.0).astype(o_ref.dtype)   # ReLU


def fold_fcu_up_params(conv_w, conv_b, bn_gamma, bn_beta, bn_mean, bn_var,
                       eps=1e-6):
    """Fold inference BatchNorm (eps=1e-6) into the 1x1 conv.

    Call ONCE at model-load / inference-init time (not per forward):
      y = scale * (W @ x + b - mean) + beta,  scale = gamma / sqrt(var + eps)
    Returns (w_folded (Cout, Cin), b_folded (Cout, 1)).
    """
    Cout = conv_w.shape[0]
    Cin = conv_w.shape[1]
    scale = bn_gamma * jax.lax.rsqrt(bn_var + eps)                 # (Cout,)
    w_folded = conv_w.reshape(Cout, Cin) * scale[:, None]          # (Cout, Cin)
    b_folded = ((conv_b - bn_mean) * scale + bn_beta).reshape(Cout, 1)
    return w_folded, b_folded


def fcu_up_global(x, w_folded, b_folded, up_stride):
    """x: (B, Cin, 441) f32, folded params -> (B, Cout, 21*s, 21*s) f32."""
    B, Cin, N = x.shape
    Cout = w_folded.shape[0]
    s = up_stride
    Hs = Ws = 21                       # the module hardcodes a 21x21 token grid
    assert N == Hs * Ws

    y = pl.pallas_call(
        _fcu_up_global_kernel,
        out_shape=jax.ShapeDtypeStruct((B, Cout, N), jnp.float32),
        grid=(1,),                                     # single step: whole
        in_specs=[                                     # problem is one block
            pl.BlockSpec((B, Cin, N), lambda i: (0, 0, 0)),
            pl.BlockSpec((Cout, Cin), lambda i: (0, 0)),
            pl.BlockSpec((Cout, 1), lambda i: (0, 0)),
        ],
        out_specs=pl.BlockSpec((B, Cout, N), lambda i: (0, 0, 0)),
    )(x, w_folded, b_folded)

    # F.interpolate(mode='nearest') to (21*s, 21*s) with an integer factor is
    # exact pixel replication: out[.., s*i+a, s*j+b] = y[.., i, j].  Pure data
    # movement -> zero-FLOP reshape/broadcast (no dense upsample matrix).
    y = y.reshape(B, Cout, Hs, 1, Ws, 1)
    y = jnp.broadcast_to(y, (B, Cout, Hs, s, Ws, s))
    return y.reshape(B, Cout, Hs * s, Ws * s)


def fcu_up_local(x, up_stride):
    """'local' branch: Rearrange('b (c p1 p2) (w1 w2) -> b c (p1 w1) (p2 w2)',
    p1=p2=up_stride, w1=w2=21).  Pure data movement, plain JAX."""
    B, C, N = x.shape
    s = up_stride
    assert C % (s * s) == 0, "channels must be divisible by up_stride**2"
    assert N == 441
    c = C // (s * s)
    xr = x.reshape(B, c, s, s, 21, 21)          # b c p1 p2 w1 w2
    xr = xr.transpose(0, 1, 2, 4, 3, 5)         # b c p1 w1 p2 w2
    return xr.reshape(B, c, s * 21, s * 21)


def _reference_global(x, conv_w, conv_b, bn_gamma, bn_beta, bn_mean, bn_var,
                      s, eps=1e-6):
    # Pure-JAX mirror of the PyTorch 'global' forward (inference BatchNorm).
    B, Cin, N = x.shape
    Cout = conv_w.shape[0]
    xr = x.reshape(B, Cin, 21, 21)
    y = jnp.einsum("oc,bchw->bohw", conv_w.reshape(Cout, Cin), xr)
    y = y + conv_b[None, :, None, None]
    y = (y - bn_mean[None, :, None, None]) * jax.lax.rsqrt(
        bn_var[None, :, None, None] + eps)
    y = y * bn_gamma[None, :, None, None] + bn_beta[None, :, None, None]
    y = jnp.maximum(y, 0.0)
    y = jnp.repeat(jnp.repeat(y, s, axis=2), s, axis=3)   # nearest interpolate
    return y


if __name__ == "__main__":
    # Small shapes consistent with the module: token grid 21x21 (N=441).
    B, Cin, Cout = 2, 8, 16
    up_stride = 2

    key = jax.random.PRNGKey(0)
    kx, kw, kb, kg, kbe, km, kv = jax.random.split(key, 7)
    x = jax.random.normal(kx, (B, Cin, 441), dtype=jnp.float32)
    conv_w = jax.random.normal(kw, (Cout, Cin, 1, 1), dtype=jnp.float32) * 0.1
    conv_b = jax.random.normal(kb, (Cout,), dtype=jnp.float32) * 0.1
    bn_gamma = 1.0 + 0.1 * jax.random.normal(kg, (Cout,), dtype=jnp.float32)
    bn_beta = 0.1 * jax.random.normal(kbe, (Cout,), dtype=jnp.float32)
    bn_mean = 0.1 * jax.random.normal(km, (Cout,), dtype=jnp.float32)
    bn_var = jax.random.uniform(kv, (Cout,), dtype=jnp.float32,
                                minval=0.5, maxval=1.5)

    # One-time fold at "init" time (hoisted out of the per-call path).
    w_folded, b_folded = fold_fcu_up_params(conv_w, conv_b, bn_gamma, bn_beta,
                                            bn_mean, bn_var)
    w_folded = jax.block_until_ready(w_folded)
    b_folded = jax.block_until_ready(b_folded)

    out = fcu_up_global(x, w_folded, b_folded, up_stride)
    out = jax.block_until_ready(out)

    ref = _reference_global(x, conv_w, conv_b, bn_gamma, bn_beta, bn_mean,
                            bn_var, up_stride)
    assert out.shape == (B, Cout, 21 * up_stride, 21 * up_stride), out.shape
    assert jnp.allclose(out, ref, atol=1e-4, rtol=1e-4), float(
        jnp.max(jnp.abs(out - ref)))

    # Exercise the 'local' branch (pure rearrange) for shape sanity.
    x_loc = jax.random.normal(kx, (B, Cout * up_stride * up_stride, 441),
                              dtype=jnp.float32)
    out_loc = jax.block_until_ready(fcu_up_local(x_loc, up_stride))
    assert out_loc.shape == (B, Cout, 21 * up_stride, 21 * up_stride)

    print("KERNEL_OK")
</pallas_src>

<mosaic_0001>
module attributes {stable_mosaic.version = 11 : i64} {
  func.func @_fcu_up_global_kernel(%arg0: i32, %arg1: memref<2x8x441xf32, #tpu.memory_space<vmem>>, %arg2: memref<16x8xf32, #tpu.memory_space<vmem>>, %arg3: memref<16x1xf32, #tpu.memory_space<vmem>>, %arg4: memref<2x16x441xf32, #tpu.memory_space<vmem>>) attributes {dimension_semantics = [#tpu.dimension_semantics<arbitrary>], iteration_bounds = array<i64: 1>, scalar_prefetch = 0 : i64, scratch_operands = 0 : i64, tpu.core_type = #tpu.core_type<tc>, window_params = [{pipeline_mode = #tpu.pipeline_mode<synchronous>, transform_indices = @transform_0, window_bounds = array<i64: 2, 8, 441>}, {pipeline_mode = #tpu.pipeline_mode<synchronous>, transform_indices = @transform_1, window_bounds = array<i64: 16, 8>}, {pipeline_mode = #tpu.pipeline_mode<synchronous>, transform_indices = @transform_2, window_bounds = array<i64: 16, 1>}, {pipeline_mode = #tpu.pipeline_mode<synchronous>, transform_indices = @transform_3, window_bounds = array<i64: 2, 16, 441>}]} {
    %c0 = arith.constant 0 : index
    %c0_0 = arith.constant 0 : index
    %0 = vector.load %arg2[%c0, %c0_0] : memref<16x8xf32, #tpu.memory_space<vmem>>, vector<16x8xf32>
    %c0_1 = arith.constant 0 : index
    %c0_2 = arith.constant 0 : index
    %1 = vector.load %arg3[%c0_1, %c0_2] : memref<16x1xf32, #tpu.memory_space<vmem>>, vector<16x1xf32>
    %c0_3 = arith.constant 0 : index
    %c0_4 = arith.constant 0 : index
    %c0_5 = arith.constant 0 : index
    %2 = vector.load %arg1[%c0_3, %c0_4, %c0_5] : memref<2x8x441xf32, #tpu.memory_space<vmem>>, vector<1x8x441xf32>
    %3 = vector.shape_cast %2 : vector<1x8x441xf32> to vector<8x441xf32>
    %cst = arith.constant dense<0.000000e+00> : vector<16x441xf32>
    %4 = tpu.matmul %0, %3, %cst {dimension_numbers = #tpu.dot_dimension_numbers<[1], [0], [0], [1], [0, 0, 1, 1], [], []>} : vector<16x8xf32>, vector<8x441xf32>, vector<16x441xf32> -> vector<16x441xf32>
    %5 = vector.broadcast %1 : vector<16x1xf32> to vector<16x441xf32>
    %6 = arith.addf %4, %5 : vector<16x441xf32>
    %cst_6 = arith.constant 0.000000e+00 : f32
    %7 = vector.broadcast %cst_6 : f32 to vector<16x441xf32>
    %8 = arith.maximumf %6, %7 : vector<16x441xf32>
    %c0_7 = arith.constant 0 : index
    %c0_8 = arith.constant 0 : index
    %c0_9 = arith.constant 0 : index
    %9 = vector.load %arg4[%c0_7, %c0_8, %c0_9] : memref<2x16x441xf32, #tpu.memory_space<vmem>>, vector<1x16x441xf32>
    %10 = vector.shape_cast %9 : vector<1x16x441xf32> to vector<16x441xf32>
    %11 = vector.shape_cast %8 : vector<16x441xf32> to vector<1x16x441xf32>
    tpu.vector_store %arg4[%c0_7, %c0_8, %c0_9], %11 {strides = array<i32>} : memref<2x16x441xf32, #tpu.memory_space<vmem>>, vector<1x16x441xf32>,
    %c1 = arith.constant 1 : index
    %c0_10 = arith.constant 0 : index
    %c0_11 = arith.constant 0 : index
    %12 = vector.load %arg1[%c1, %c0_10, %c0_11] : memref<2x8x441xf32, #tpu.memory_space<vmem>>, vector<1x8x441xf32>
    %13 = vector.shape_cast %12 : vector<1x8x441xf32> to vector<8x441xf32>
    %cst_12 = arith.constant dense<0.000000e+00> : vector<16x441xf32>
    %14 = tpu.matmul %0, %13, %cst_12 {dimension_numbers = #tpu.dot_dimension_numbers<[1], [0], [0], [1], [0, 0, 1, 1], [], []>} : vector<16x8xf32>, vector<8x441xf32>, vector<16x441xf32> -> vector<16x441xf32>
    %15 = vector.broadcast %1 : vector<16x1xf32> to vector<16x441xf32>
    %16 = arith.addf %14, %15 : vector<16x441xf32>
    %cst_13 = arith.constant 0.000000e+00 : f32
    %17 = vector.broadcast %cst_13 : f32 to vector<16x441xf32>
    %18 = arith.maximumf %16, %17 : vector<16x441xf32>
    %c1_14 = arith.constant 1 : index
    %c0_15 = arith.constant 0 : index
    %c0_16 = arith.constant 0 : index
    %19 = vector.load %arg4[%c1_14, %c0_15, %c0_16] : memref<2x16x441xf32, #tpu.memory_space<vmem>>, vector<1x16x441xf32>
    %20 = vector.shape_cast %19 : vector<1x16x441xf32> to vector<16x441xf32>
    %21 = vector.shape_cast %18 : vector<16x441xf32> to vector<1x16x441xf32>
    tpu.vector_store %arg4[%c1_14, %c0_15, %c0_16], %21 {strides = array<i32>} : memref<2x16x441xf32, #tpu.memory_space<vmem>>, vector<1x16x441xf32>,
    return
  }
  func.func @transform_0(%arg0: i32) -> (i32, i32, i32) {
    %c0_i32 = arith.constant 0 : i32
    %c0_i32_0 = arith.constant 0 : i32
    %c0_i32_1 = arith.constant 0 : i32
    %c0_i32_2 = arith.constant 0 : i32
    return %c0_i32, %c0_i32_0, %c0_i32_1 : i32, i32, i32
  }
  func.func @transform_1(%arg0: i32) -> (i32, i32) {
    %c0_i32 = arith.constant 0 : i32
    %c0_i32_0 = arith.constant 0 : i32
    %c0_i32_1 = arith.constant 0 : i32
    return %c0_i32, %c0_i32_0 : i32, i32
  }
  func.func @transform_2(%arg0: i32) -> (i32, i32) {
    %c0_i32 = arith.constant 0 : i32
    %c0_i32_0 = arith.constant 0 : i32
    %c0_i32_1 = arith.constant 0 : i32
    return %c0_i32, %c0_i32_0 : i32, i32
  }
  func.func @transform_3(%arg0: i32) -> (i32, i32, i32) {
    %c0_i32 = arith.constant 0 : i32
    %c0_i32_0 = arith.constant 0 : i32
    %c0_i32_1 = arith.constant 0 : i32
    %c0_i32_2 = arith.constant 0 : i32
    return %c0_i32, %c0_i32_0, %c0_i32_1 : i32, i32, i32
  }
}

</mosaic_0001>

<llo_original>
// kernel: tpu_custom_call.1
$region0: #{tpu_custom_call.1}
  #allocation0 [shape = 'u32[]', space=smem, size = 0x4, offset = 0x4, fixed_abs, tag = 'smem constant byte address 0x4 - core index']
  #allocation1 [shape = 'u32[144,128]{1,0:T(1,128)}', space=vmem, size = 0x12000, scoped, tag = 'internal scratch']
  %s0 = inlined_call_operand.hbm [shape: f32[2,8,441], index: 0, kind: input, shape index: {}]
  %s1 = inlined_call_operand.vmem [shape: f32[16,8], index: 1, kind: input, shape index: {}]
  %s2 = inlined_call_operand.vmem [shape: f32[16,1], index: 2, kind: input, shape index: {}]
  %s3 = inlined_call_operand.hbm [shape: f32[2,16,441], index: 3, kind: output, shape index: {}]
  %s4 = sld [smem:[#allocation0]]
  $region26: #{tpu_custom_call.1} parent=0
    _
  %s6 = ssub.s32 1, %s4
  %s7 = scalar_select 0, %s6, %s4
  $region1: #{tpu_custom_call.1} parent=0
    #allocation2 [shape = 'u8[32768]{0}', space=vmem, size = 0x8000, scoped, tag = 'input window, operand 0, single buffered']
    #allocation3 [shape = 's32[1]{0}', space=sflag, size = 0x4, scoped, tag = 'scoped memory for tpu_custom_call.1']
    #allocation4 [shape = 's32[1]{0}', space=sflag, size = 0x4, scoped, tag = 'scoped memory for tpu_custom_call.1']
    #allocation5 [shape = 'u8[65536]{0}', space=vmem, size = 0x10000, scoped, tag = 'output window, operand 0, single buffered']
    %8 = vsyncpa [#allocation3], 0
    %9 = vsyncpa [#allocation4], 0
    // Predicated region
    $region2: #{tpu_custom_call.1} parent=1 // pred_check
      _
    $region3: #{tpu_custom_call.1} parent=1 // pred_check_branch
      %11 = sbr.rel (0) target = $region5
    $region4: #{tpu_custom_call.1} parent=1 // pred_region
      %s13 = ssub.s32 1024, 1024
      %14 = vsyncadd [#allocation3], %s13
      %s15 = sshll.u32 [#allocation2], 4
      %s16 = int_to_ptr.vmem [resolvable:$true] %s15
      %21 = dma.hbm_to_vmem [thread:$0]  %s0, 1024, %s16, [#allocation3], 512, 512, 32
    $region5: #{tpu_custom_call.1} parent=1 // pred_fallthru
      _
    // Predicated region
    $region6: #{tpu_custom_call.1} parent=1 // pred_check
      _
    $region7: #{tpu_custom_call.1} parent=1 // pred_check_branch
      %23 = sbr.rel (0) target = $region9
    $region8: #{tpu_custom_call.1} parent=1 // pred_region
      _
    $region9: #{tpu_custom_call.1} parent=1 // pred_fallthru
      _
    // Predicated region
    $region10: #{tpu_custom_call.1} parent=1 // pred_check
      _
    $region11: #{tpu_custom_call.1} parent=1 // pred_check_branch
      %25 = sbr.rel (0) target = $region13
    $region12: #{tpu_custom_call.1} parent=1 // pred_region
      _
    $region13: #{tpu_custom_call.1} parent=1 // pred_fallthru
      _
    // Predicated region
    $region14: #{tpu_custom_call.1} parent=1 // pred_check
      _
    $region15: #{tpu_custom_call.1} parent=1 // pred_check_branch
      %27 = sbr.rel (0) target = $region17
    $region16: #{tpu_custom_call.1} parent=1 // pred_region
      %28 = dma.done [#allocation3], 1024
    $region17: #{tpu_custom_call.1} parent=1 // pred_fallthru
      _
    %v29 = vld [vmem:[%s1] sm:$0xff]
    %v30 = vld [vmem:[%s1 + $0x8] sm:$0xff]
    %v31 = vld [vmem:[%s2] sm:$0xff]
    %v32 = vld [vmem:[%s2 + $0x8] sm:$0xff]
    %v33 = vld [vmem:[#allocation2] sm:$0xff]
    %v34 = vld [vmem:[#allocation2 + $0x8] sm:$0xff]
    %v35 = vld [vmem:[#allocation2 + $0x10] sm:$0xff]
    %v36 = vld [vmem:[#allocation2 + $0x18] sm:$0xff]
    %38 = vset.pattern.permute.xlu0 0
    %39 = vperm.xlu0 %38, %v31
    %v40 = vpop.permute.xlu0 %39
    %43 = vset.pattern.permute.xlu0 0
    %44 = vperm.xlu0 %43, %v32
    %v45 = vpop.permute.xlu0 %44
    %vm47 = vcmask 64512
    %v49 = vsel %vm47, %v29, 0
    %v52 = vsel %vm47, %v30, 0
    %54 = vmatprep.subr.mxu0 0.0
    %55 = vmatpush1.msra.mxu0 0.0
    %56 = vmatprep.subr.mxu0 0.0
    %57 = vmatpush1.msra.mxu0 0.0
    %58 = vmatprep.subr.mxu0 0.0
    %59 = vmatpush1.msra.mxu0 0.0
    %60 = vmatprep.subr.mxu0 0.0
    %61 = vmatpush1.msra.mxu0 0.0
    %62 = vmatprep.subr.mxu0 0.0
    %63 = vmatpush1.msra.mxu0 0.0
    %64 = vmatprep.subr.mxu0 0.0
    %65 = vmatpush1.msra.mxu0 0.0
    %66 = vmatprep.subr.mxu0 0.0
    %67 = vmatpush1.msra.mxu0 0.0
    %68 = vmatprep.subr.mxu0 0.0
    %69 = vmatpush1.msra.mxu0 0.0
    %70 = vmatprep.subr.mxu0 0.0
    %71 = vmatpush1.msra.mxu0 0.0
    %72 = vmatprep.subr.mxu0 0.0
    %73 = vmatpush1.msra.mxu0 0.0
    %74 = vmatprep.subr.mxu0 0.0
    %75 = vmatpush1.msra.mxu0 0.0
    %76 = vmatprep.subr.mxu0 0.0
    %77 = vmatpush1.msra.mxu0 0.0
    %78 = vmatprep.subr.mxu0 0.0
    %79 = vmatpush1.msra.mxu0 0.0
    %80 = vmatprep.subr.mxu0 0.0
    %81 = vmatpush1.msra.mxu0 0.0
    %82 = vmatprep.subr.mxu0 0.0
    %83 = vmatpush1.msra.mxu0 0.0
    %84 = vmatprep.subr.mxu0 %v34
    %85 = vmatpush1.msra.mxu0 %v33
    %86 = vmatprep.subr.mxu0 0.0
    %87 = vmatpush2.msra.mxu0 0.0
    %88 = vmatprep.subr.mxu0 0.0
    %89 = vmatpush2.msra.mxu0 0.0
    %90 = vmatprep.subr.mxu0 0.0
    %91 = vmatpush2.msra.mxu0 0.0
    %92 = vmatprep.subr.mxu0 0.0
    %93 = vmatpush2.msra.mxu0 0.0
    %94 = vmatprep.subr.mxu0 0.0
    %95 = vmatpush2.msra.mxu0 0.0
    %96 = vmatprep.subr.mxu0 0.0
    %97 = vmatpush2.msra.mxu0 0.0
    %98 = vmatprep.subr.mxu0 0.0
    %99 = vmatpush2.msra.mxu0 0.0
    %100 = vmatprep.subr.mxu0 0.0
    %101 = vmatpush2.msra.mxu0 0.0
    %102 = vmatprep.subr.mxu0 0.0
    %103 = vmatpush2.msra.mxu0 0.0
    %104 = vmatprep.subr.mxu0 0.0
    %105 = vmatpush2.msra.mxu0 0.0
    %106 = vmatprep.subr.mxu0 0.0
    %107 = vmatpush2.msra.mxu0 0.0
    %108 = vmatprep.subr.mxu0 0.0
    %109 = vmatpush2.msra.mxu0 0.0
    %110 = vmatprep.subr.mxu0 0.0
    %111 = vmatpush2.msra.mxu0 0.0
    %112 = vmatprep.subr.mxu0 0.0
    %113 = vmatpush2.msra.mxu0 0.0
    %114 = vmatprep.subr.mxu0 0.0
    %115 = vmatpush2.msra.mxu0 0.0
    %116 = vmatprep.subr.mxu0 0.0
    %117 = vmatpush2.msra.mxu0 0.0
    %118 = vmatprep.mubr.f32.mxu0 0.0
    %119 = vmatmul.mubr.f32.gmra.mxu0 %v49
    %v120 = vpop.f32.mrf.mxu0
    %v121 = vadd.f32 %v40, %v120
    %v122 = vpop.f32.mrf.mxu0
    %v123 = vadd.f32 %v40, %v122
    %124 = vmatprep.mubr.f32.mxu0 0.0
    %125 = vmatmul.mubr.f32.gmra.mxu0 %v52
    %v126 = vpop.f32.mrf.mxu0
    %v127 = vadd.f32 %v45, %v126
    %v128 = vpop.f32.mrf.mxu0
    %v129 = vadd.f32 %v45, %v128
    %130 = vdwg.mxu0
    %131 = vmatprep.subr.mxu0 0.0
    %132 = vmatpush1.msra.mxu0 0.0
    %133 = vmatprep.subr.mxu0 0.0
    %134 = vmatpush1.msra.mxu0 0.0
    %135 = vmatprep.subr.mxu0 0.0
    %136 = vmatpush1.msra.mxu0 0.0
    %137 = vmatprep.subr.mxu0 0.0
    %138 = vmatpush1.msra.mxu0 0.0
    %139 = vmatprep.subr.mxu0 0.0
    %140 = vmatpush1.msra.mxu0 0.0
    %141 = vmatprep.subr.mxu0 0.0
    %142 = vmatpush1.msra.mxu0 0.0
    %143 = vmatprep.subr.mxu0 0.0
    %144 = vmatpush1.msra.mxu0 0.0
    %145 = vmatprep.subr.mxu0 0.0
    %146 = vmatpush1.msra.mxu0 0.0
    %147 = vmatprep.subr.mxu0 0.0
    %148 = vmatpush1.msra.mxu0 0.0
    %149 = vmatprep.subr.mxu0 0.0
    %150 = vmatpush1.msra.mxu0 0.0
    %151 = vmatprep.subr.mxu0 0.0
    %152 = vmatpush1.msra.mxu0 0.0
    %153 = vmatprep.subr.mxu0 0.0
    %154 = vmatpush1.msra.mxu0 0.0
    %155 = vmatprep.subr.mxu0 0.0
    %156 = vmatpush1.msra.mxu0 0.0
    %157 = vmatprep.subr.mxu0 0.0
    %158 = vmatpush1.msra.mxu0 0.0
    %159 = vmatprep.subr.mxu0 0.0
    %160 = vmatpush1.msra.mxu0 0.0
    %161 = vmatprep.subr.mxu0 %v36
    %162 = vmatpush1.msra.mxu0 %v35
    %163 = vmatprep.subr.mxu0 0.0
    %164 = vmatpush2.msra.mxu0 0.0
    %165 = vmatprep.subr.mxu0 0.0
    %166 = vmatpush2.msra.mxu0 0.0
    %167 = vmatprep.subr.mxu0 0.0
    %168 = vmatpush2.msra.mxu0 0.0
    %169 = vmatprep.subr.mxu0 0.0
    %170 = vmatpush2.msra.mxu0 0.0
    %171 = vmatprep.subr.mxu0 0.0
    %172 = vmatpush2.msra.mxu0 0.0
    %173 = vmatprep.subr.mxu0 0.0
    %174 = vmatpush2.msra.mxu0 0.0
    %175 = vmatprep.subr.mxu0 0.0
    %176 = vmatpush2.msra.mxu0 0.0
    %177 = vmatprep.subr.mxu0 0.0
    %178 = vmatpush2.msra.mxu0 0.0
    %179 = vmatprep.subr.mxu0 0.0
    %180 = vmatpush2.msra.mxu0 0.0
    %181 = vmatprep.subr.mxu0 0.0
    %182 = vmatpush2.msra.mxu0 0.0
    %183 = vmatprep.subr.mxu0 0.0
    %184 = vmatpush2.msra.mxu0 0.0
    %185 = vmatprep.subr.mxu0 0.0
    %186 = vmatpush2.msra.mxu0 0.0
    %187 = vmatprep.subr.mxu0 0.0
    %188 = vmatpush2.msra.mxu0 0.0
    %189 = vmatprep.subr.mxu0 0.0
    %190 = vmatpush2.msra.mxu0 0.0
    %191 = vmatprep.subr.mxu0 0.0
    %192 = vmatpush2.msra.mxu0 0.0
    %193 = vmatprep.subr.mxu0 0.0
    %194 = vmatpush2.msra.mxu0 0.0
    %195 = vmatprep.mubr.f32.mxu0 0.0
    %196 = vmatmul.mubr.f32.gmra.mxu0 %v49
    %v197 = vpop.f32.mrf.mxu0
    %v198 = vadd.f32 %v40, %v197
    %v199 = vpop.f32.mrf.mxu0
    %v200 = vadd.f32 %v40, %v199
    %201 = vmatprep.mubr.f32.mxu0 0.0
    %202 = vmatmul.mubr.f32.gmra.mxu0 %v52
    %v203 = vpop.f32.mrf.mxu0
    %v204 = vadd.f32 %v45, %v203
    %v205 = vpop.f32.mrf.mxu0
    %v206 = vadd.f32 %v45, %v205
    %207 = vdwg.mxu0
    %v208 = vmax.f32 %v121, 0.0
    %v209 = vmax.f32 %v123, 0.0
    %v210 = vmax.f32 %v198, 0.0
    %v211 = vmax.f32 %v200, 0.0
    %v212 = vmax.f32 %v127, 0.0
    %v213 = vmax.f32 %v129, 0.0
    %v214 = vmax.f32 %v204, 0.0
    %v215 = vmax.f32 %v206, 0.0
    %216 = vst [vmem:[#allocation5] sm:$0xff] %v208
    %217 = vst [vmem:[#allocation5 + $0x8] sm:$0xff] %v209
    %218 = vst [vmem:[#allocation5 + $0x10] sm:$0xff] %v210
    %vm219 = vcmask 465920
    %220 = vst.msk [vmem:[#allocation5 + $0x18] sm:$0xff] %vm219, %v211
    %221 = vst [vmem:[#allocation5 + $0x20] sm:$0xff] %v212
    %222 = vst [vmem:[#allocation5 + $0x28] sm:$0xff] %v213
    %223 = vst [vmem:[#allocation5 + $0x30] sm:$0xff] %v214
    %224 = vst.msk [vmem:[#allocation5 + $0x38] sm:$0xff] %vm219, %v215
    %s225 = scalar_lea.vmem [#allocation2], 32
    %v226 = vld [vmem:[%s225] sm:$0xff]
    %v227 = vld [vmem:[%s225 + $0x8] sm:$0xff]
    %v228 = vld [vmem:[%s225 + $0x10] sm:$0xff]
    %v229 = vld [vmem:[%s225 + $0x18] sm:$0xff]
    %230 = vmatprep.subr.mxu0 0.0
    %231 = vmatpush1.msra.mxu0 0.0
    %232 = vmatprep.subr.mxu0 0.0
    %233 = vmatpush1.msra.mxu0 0.0
    %234 = vmatprep.subr.mxu0 0.0
    %235 = vmatpush1.msra.mxu0 0.0
    %236 = vmatprep.subr.mxu0 0.0
    %237 = vmatpush1.msra.mxu0 0.0
    %238 = vmatprep.subr.mxu0 0.0
    %239 = vmatpush1.msra.mxu0 0.0
    %240 = vmatprep.subr.mxu0 0.0
    %241 = vmatpush1.msra.mxu0 0.0
    %242 = vmatprep.subr.mxu0 0.0
    %243 = vmatpush1.msra.mxu0 0.0
    %244 = vmatprep.subr.mxu0 0.0
    %245 = vmatpush1.msra.mxu0 0.0
    %246 = vmatprep.subr.mxu0 0.0
    %247 = vmatpush1.msra.mxu0 0.0
    %248 = vmatprep.subr.mxu0 0.0
    %249 = vmatpush1.msra.mxu0 0.0
    %250 = vmatprep.subr.mxu0 0.0
    %251 = vmatpush1.msra.mxu0 0.0
    %252 = vmatprep.subr.mxu0 0.0
    %253 = vmatpush1.msra.mxu0 0.0
    %254 = vmatprep.subr.mxu0 0.0
    %255 = vmatpush1.msra.mxu0 0.0
    %256 = vmatprep.subr.mxu0 0.0
    %257 = vmatpush1.msra.mxu0 0.0
    %258 = vmatprep.subr.mxu0 0.0
    %259 = vmatpush1.msra.mxu0 0.0
    %260 = vmatprep.subr.mxu0 %v227
    %261 = vmatpush1.msra.mxu0 %v226
    %262 = vmatprep.subr.mxu0 0.0
    %263 = vmatpush2.msra.mxu0 0.0
    %264 = vmatprep.subr.mxu0 0.0
    %265 = vmatpush2.msra.mxu0 0.0
    %266 = vmatprep.subr.mxu0 0.0
    %267 = vmatpush2.msra.mxu0 0.0
    %268 = vmatprep.subr.mxu0 0.0
    %269 = vmatpush2.msra.mxu0 0.0
    %270 = vmatprep.subr.mxu0 0.0
    %271 = vmatpush2.msra.mxu0 0.0
    %272 = vmatprep.subr.mxu0 0.0
    %273 = vmatpush2.msra.mxu0 0.0
    %274 = vmatprep.subr.mxu0 0.0
    %275 = vmatpush2.msra.mxu0 0.0
    %276 = vmatprep.subr.mxu0 0.0
    %277 = vmatpush2.msra.mxu0 0.0
    %278 = vmatprep.subr.mxu0 0.0
    %279 = vmatpush2.msra.mxu0 0.0
    %280 = vmatprep.subr.mxu0 0.0
    %281 = vmatpush2.msra.mxu0 0.0
    %282 = vmatprep.subr.mxu0 0.0
    %283 = vmatpush2.msra.mxu0 0.0
    %284 = vmatprep.subr.mxu0 0.0
    %285 = vmatpush2.msra.mxu0 0.0
    %286 = vmatprep.subr.mxu0 0.0
    %287 = vmatpush2.msra.mxu0 0.0
    %288 = vmatprep.subr.mxu0 0.0
    %289 = vmatpush2.msra.mxu0 0.0
    %290 = vmatprep.subr.mxu0 0.0
    %291 = vmatpush2.msra.mxu0 0.0
    %292 = vmatprep.subr.mxu0 0.0
    %293 = vmatpush2.msra.mxu0 0.0
    %294 = vmatprep.mubr.f32.mxu0 0.0
    %295 = vmatmul.mubr.f32.gmra.mxu0 %v49
    %v296 = vpop.f32.mrf.mxu0
    %v297 = vadd.f32 %v40, %v296
    %v298 = vpop.f32.mrf.mxu0
    %v299 = vadd.f32 %v40, %v298
    %300 = vmatprep.mubr.f32.mxu0 0.0
    %301 = vmatmul.mubr.f32.gmra.mxu0 %v52
    %v302 = vpop.f32.mrf.mxu0
    %v303 = vadd.f32 %v45, %v302
    %v304 = vpop.f32.mrf.mxu0
    %v305 = vadd.f32 %v45, %v304
    %306 = vdwg.mxu0
    %307 = vmatprep.subr.mxu0 0.0
    %308 = vmatpush1.msra.mxu0 0.0
    %309 = vmatprep.subr.mxu0 0.0
    %310 = vmatpush1.msra.mxu0 0.0
    %311 = vmatprep.subr.mxu0 0.0
    %312 = vmatpush1.msra.mxu0 0.0
    %313 = vmatprep.subr.mxu0 0.0
    %314 = vmatpush1.msra.mxu0 0.0
    %315 = vmatprep.subr.mxu0 0.0
    %316 = vmatpush1.msra.mxu0 0.0
    %317 = vmatprep.subr.mxu0 0.0
    %318 = vmatpush1.msra.mxu0 0.0
    %319 = vmatprep.subr.mxu0 0.0
    %320 = vmatpush1.msra.mxu0 0.0
    %321 = vmatprep.subr.mxu0 0.0
    %322 = vmatpush1.msra.mxu0 0.0
    %323 = vmatprep.subr.mxu0 0.0
    %324 = vmatpush1.msra.mxu0 0.0
    %325 = vmatprep.subr.mxu0 0.0
    %326 = vmatpush1.msra.mxu0 0.0
    %327 = vmatprep.subr.mxu0 0.0
    %328 = vmatpush1.msra.mxu0 0.0
    %329 = vmatprep.subr.mxu0 0.0
    %330 = vmatpush1.msra.mxu0 0.0
    %331 = vmatprep.subr.mxu0 0.0
    %332 = vmatpush1.msra.mxu0 0.0
    %333 = vmatprep.subr.mxu0 0.0
    %334 = vmatpush1.msra.mxu0 0.0
    %335 = vmatprep.subr.mxu0 0.0
    %336 = vmatpush1.msra.mxu0 0.0
    %337 = vmatprep.subr.mxu0 %v229
    %338 = vmatpush1.msra.mxu0 %v228
    %339 = vmatprep.subr.mxu0 0.0
    %340 = vmatpush2.msra.mxu0 0.0
    %341 = vmatprep.subr.mxu0 0.0
    %342 = vmatpush2.msra.mxu0 0.0
    %343 = vmatprep.subr.mxu0 0.0
    %344 = vmatpush2.msra.mxu0 0.0
    %345 = vmatprep.subr.mxu0 0.0
    %346 = vmatpush2.msra.mxu0 0.0
    %347 = vmatprep.subr.mxu0 0.0
    %348 = vmatpush2.msra.mxu0 0.0
    %349 = vmatprep.subr.mxu0 0.0
    %350 = vmatpush2.msra.mxu0 0.0
    %351 = vmatprep.subr.mxu0 0.0
    %352 = vmatpush2.msra.mxu0 0.0
    %353 = vmatprep.subr.mxu0 0.0
    %354 = vmatpush2.msra.mxu0 0.0
    %355 = vmatprep.subr.mxu0 0.0
    %356 = vmatpush2.msra.mxu0 0.0
    %357 = vmatprep.subr.mxu0 0.0
    %358 = vmatpush2.msra.mxu0 0.0
    %359 = vmatprep.subr.mxu0 0.0
    %360 = vmatpush2.msra.mxu0 0.0
    %361 = vmatprep.subr.mxu0 0.0
    %362 = vmatpush2.msra.mxu0 0.0
    %363 = vmatprep.subr.mxu0 0.0
    %364 = vmatpush2.msra.mxu0 0.0
    %365 = vmatprep.subr.mxu0 0.0
    %366 = vmatpush2.msra.mxu0 0.0
    %367 = vmatprep.subr.mxu0 0.0
    %368 = vmatpush2.msra.mxu0 0.0
    %369 = vmatprep.subr.mxu0 0.0
    %370 = vmatpush2.msra.mxu0 0.0
    %371 = vmatprep.mubr.f32.mxu0 0.0
    %372 = vmatmul.mubr.f32.gmra.mxu0 %v49
    %v373 = vpop.f32.mrf.mxu0
    %v374 = vadd.f32 %v40, %v373
    %v375 = vpop.f32.mrf.mxu0
    %v376 = vadd.f32 %v40, %v375
    %377 = vmatprep.mubr.f32.mxu0 0.0
    %378 = vmatmul.mubr.f32.gmra.mxu0 %v52
    %v379 = vpop.f32.mrf.mxu0
    %v380 = vadd.f32 %v45, %v379
    %v381 = vpop.f32.mrf.mxu0
    %v382 = vadd.f32 %v45, %v381
    %383 = vdwg.mxu0
    %v384 = vmax.f32 %v297, 0.0
    %v385 = vmax.f32 %v299, 0.0
    %v386 = vmax.f32 %v374, 0.0
    %v387 = vmax.f32 %v376, 0.0
    %v388 = vmax.f32 %v303, 0.0
    %v389 = vmax.f32 %v305, 0.0
    %v390 = vmax.f32 %v380, 0.0
    %v391 = vmax.f32 %v382, 0.0
    %s392 = scalar_lea.vmem [#allocation5], 64
    %393 = vst [vmem:[%s392] sm:$0xff] %v384
    %394 = vst [vmem:[%s392 + $0x8] sm:$0xff] %v385
    %395 = vst [vmem:[%s392 + $0x10] sm:$0xff] %v386
    %396 = vst.msk [vmem:[%s392 + $0x18] sm:$0xff] %vm219, %v387
    %397 = vst [vmem:[%s392 + $0x20] sm:$0xff] %v388
    %398 = vst [vmem:[%s392 + $0x28] sm:$0xff] %v389
    %399 = vst [vmem:[%s392 + $0x30] sm:$0xff] %v390
    %400 = vst.msk [vmem:[%s392 + $0x38] sm:$0xff] %vm219, %v391
    // Predicated region
    $region18: #{tpu_custom_call.1} parent=1 // pred_check
      _
    $region19: #{tpu_custom_call.1} parent=1 // pred_check_branch
      %402 = sbr.rel (0) target = $region21
    $region20: #{tpu_custom_call.1} parent=1 // pred_region
      %s404 = ssub.s32 2048, 2048
      %405 = vsyncadd [#allocation4], %s404
      %s406 = sshll.u32 [#allocation5], 4
      %s407 = int_to_ptr.vmem [resolvable:$true] %s406
      %412 = dma.vmem_to_hbm [thread:$0]  %s407, 2048, %s3, [#allocation4], 512, 512, 32
    $region21: #{tpu_custom_call.1} parent=1 // pred_fallthru
      _
    // Predicated region
    $region22: #{tpu_custom_call.1} parent=1 // pred_check
      _
    $region23: #{tpu_custom_call.1} parent=1 // pred_check_branch
      %414 = sbr.rel (0) target = $region25
    $region24: #{tpu_custom_call.1} parent=1 // pred_region
      %415 = dma.done [#allocation4], 2048
    $region25: #{tpu_custom_call.1} parent=1 // pred_fallthru
      _
    %416 = vsyncpa [#allocation3], 1
    %417 = vsyncpa [#allocation4], 1

</llo_original>
